<compile_context>
chip_gen: v7x
topology: tpu7x:2x2x1
jax: 0.10.0
libtpu: 0.0.40
codegen_flags: <defaults>
</compile_context>

<pallas_src>
import functools

import jax
import jax.numpy as jnp
from jax.experimental import pallas as pl
from jax.experimental.pallas import tpu as pltpu


def _leaky(x):
    # LeakyReLU(0.2) as a single VPU max (valid because slope < 1).
    return jnp.maximum(x, 0.2 * x)


# ----------------------------------------------------------------------------
# Kernel 1: whole spatial axis resident in VMEM (small / medium images).
# ----------------------------------------------------------------------------
def _resident_kernel(x_ref, w1_ref, b1_ref, w2_ref, w3_ref, b3_ref, o_ref, *,
                     use_sigmoid, block_n, p_total, compute_dtype):
    # x_ref: (block_n, C_in, P)   o_ref: (block_n, 1, P)
    w1 = w1_ref[...].astype(compute_dtype)      # (F,  C_in)
    w2 = w2_ref[...].astype(compute_dtype)      # (2F, F)
    b1 = b1_ref[...]                            # (F, 1)  f32
    w3 = w3_ref[...]                            # (1, 2F) f32
    b3 = b3_ref[0, 0]                           # scalar (SMEM)
    inv_p = 1.0 / p_total

    # Static unroll; block_n is capped (<= 4) so live ranges stay bounded.
    for n in range(block_n):
        x = x_ref[n].astype(compute_dtype)                         # (C_in, P)

        # Conv1 (1x1) + LeakyReLU(0.2)           -- MXU, f32 accumulate.
        h1 = jnp.dot(w1, x, preferred_element_type=jnp.float32) + b1
        h1 = _leaky(h1)                                            # (F, P)

        # Conv2 (1x1); bias omitted: exactly cancelled by the InstanceNorm mean.
        h2 = jnp.dot(w2, h1.astype(compute_dtype),
                     preferred_element_type=jnp.float32)           # (2F, P)

        # InstanceNorm2d(2F, affine=False): one-pass per-channel statistics
        # over pixels (f32 sums, biased variance, eps=1e-5 as in PyTorch).
        mean = jnp.sum(h2, axis=1, keepdims=True) * inv_p          # (2F, 1)
        ex2 = jnp.sum(h2 * h2, axis=1, keepdims=True) * inv_p
        var = jnp.maximum(ex2 - mean * mean, 0.0)
        scale = jax.lax.rsqrt(var + 1e-5)
        h2 = _leaky(h2 * scale + (-mean * scale))                  # norm + act

        # Conv3 (2F -> 1) + bias on the (otherwise idle) MXU.
        h3 = jnp.dot(w3, h2, preferred_element_type=jnp.float32) + b3  # (1, P)
        if use_sigmoid:
            h3 = jax.nn.sigmoid(h3)
        o_ref[n] = h3.astype(o_ref.dtype)


# ----------------------------------------------------------------------------
# Kernel 2: P-tiled two-pass variant (large images / v7x 64 MiB VMEM).
# ----------------------------------------------------------------------------
def _tiled_kernel(x_ref, w1_ref, b1_ref, w2_ref, w3_ref, b3_ref, o_ref,
                  sum_ref, sq_ref, *, use_sigmoid, block_n, p_total,
                  compute_dtype):
    # grid = (N // block_n, 2, P // p_tile): phase 0 walks the pixel tiles and
    # accumulates per-(sample, channel) sum / sum-of-squares of the conv2
    # output into VMEM scratch; phase 1 re-runs the cheap 1x1 convs, normalizes
    # with the finished statistics and writes the output.
    phase = pl.program_id(1)
    p_idx = pl.program_id(2)

    w1 = w1_ref[...].astype(compute_dtype)
    w2 = w2_ref[...].astype(compute_dtype)
    b1 = b1_ref[...]
    w3 = w3_ref[...]
    b3 = b3_ref[0, 0]
    inv_p = 1.0 / p_total

    def conv12(n):
        x = x_ref[n].astype(compute_dtype)                         # (C_in, tp)
        h1 = _leaky(jnp.dot(w1, x, preferred_element_type=jnp.float32) + b1)
        return jnp.dot(w2, h1.astype(compute_dtype),
                       preferred_element_type=jnp.float32)         # (2F, tp)

    @pl.when(jnp.logical_and(phase == 0, p_idx == 0))
    def _():
        sum_ref[...] = jnp.zeros_like(sum_ref)
        sq_ref[...] = jnp.zeros_like(sq_ref)

    @pl.when(phase == 0)
    def _():
        for n in range(block_n):
            h2 = conv12(n)
            sum_ref[n] += jnp.sum(h2, axis=1, keepdims=True)
            sq_ref[n] += jnp.sum(h2 * h2, axis=1, keepdims=True)

    @pl.when(phase == 1)
    def _():
        for n in range(block_n):
            h2 = conv12(n)
            mean = sum_ref[n] * inv_p                              # (2F, 1)
            var = jnp.maximum(sq_ref[n] * inv_p - mean * mean, 0.0)
            scale = jax.lax.rsqrt(var + 1e-5)
            h2 = _leaky(h2 * scale + (-mean * scale))
            h3 = jnp.dot(w3, h2, preferred_element_type=jnp.float32) + b3
            if use_sigmoid:
                h3 = jax.nn.sigmoid(h3)
            o_ref[n] = h3.astype(o_ref.dtype)


# ----------------------------------------------------------------------------
# Wrapper: tiling / VMEM budgeting and pallas_call plumbing.
# ----------------------------------------------------------------------------
def _pick_block_n(n, per_sample_bytes, budget_bytes, requested):
    # Largest divisor of n that keeps >=2 grid steps when n >= 2 (feeds both
    # v7x TensorCores), keeps the statically unrolled per-sample loop small
    # (<= 4), and fits the working-set budget.  Explicit `requested` overrides
    # the caps but is still clipped to a divisor within budget.
    if requested is not None:
        cap = max(1, min(int(requested), n))
    else:
        cap = 1 if n <= 1 else min(4, n // 2)
    while cap > 1 and cap * per_sample_bytes > budget_bytes:
        cap -= 1
    best = 1
    for d in range(1, cap + 1):
        if n % d == 0:
            best = d
    return best


def _vmem_limit_bytes(phys_vmem_bytes, need_bytes):
    # 2x margin over the estimated need, at least 16 MiB, and ~25% physical
    # headroom (v5e/v6e: 128 MiB, v7x: 64 MiB per TensorCore).
    cap = (phys_vmem_bytes * 3) // 4
    return int(min(cap, max(2 * need_bytes, 16 << 20)))


def pixel_discriminator(x_nchw, params, *, use_sigmoid=True,
                        compute_dtype=jnp.float32, block_n=None, p_tile=None):
    """PixelDiscriminator forward.  x_nchw: (N, C_in, H, W) -> (N, 1, H, W) f32.

    compute_dtype: dtype of the conv1/conv2 MXU operands (bf16 is optional; the
    kernel is VALU-bound, so this is a minor knob).  InstanceNorm statistics,
    conv3 and the sigmoid always run in f32.
    p_tile: force the P-tiled two-pass variant with this pixel-tile size (a
    multiple of 128 dividing H*W); by default it is chosen automatically when
    the full-spatial working set does not fit the VMEM budget.
    """
    w1, b1, w2, b2, w3, b3 = params
    del b2  # Conv2 bias is exactly cancelled by the affine-free InstanceNorm.

    N, C_in, H, W = x_nchw.shape
    P = H * W
    F = w1.shape[0]
    F2 = w2.shape[0]
    assert w1.shape == (F, C_in) and b1.shape == (F, 1)
    assert w2.shape == (F2, F) and w3.shape == (1, F2) and b3.shape == (1, 1)

    x_ncp = x_nchw.reshape(N, C_in, P)          # free reshape, no transpose
    x_itemsize = jnp.dtype(x_nchw.dtype).itemsize

    c_pad = -(-C_in // 8) * 8                   # sublane-padded input channels
    per_pixel_f32 = (c_pad + F + 3 * F2) * 4    # x + h1 + h2 + temps, per pixel

    try:
        phys_vmem = int(pltpu.get_tpu_info().vmem_capacity_bytes)
    except Exception:
        phys_vmem = 64 << 20                    # conservative (v7x per-core VMEM)
    budget = max(4 << 20, phys_vmem // 2)       # per-step live working-set budget

    # ---- choose resident (full P in VMEM) vs P-tiled two-pass variant -------
    if p_tile is None and per_pixel_f32 * P > budget and P % 128 == 0:
        tile_budget = max(1, budget // 4)       # keep >= ~4 pipeline steps
        target = (tile_budget // per_pixel_f32) // 128 * 128
        target = int(min(P, 8192, max(128, target)))
        for cand in range(target, 0, -128):
            if P % cand == 0:
                p_tile = cand
                break
    if p_tile is not None:
        assert P % p_tile == 0 and p_tile % 128 == 0, (P, p_tile)
    # TODO(synk): if P is huge but not a multiple of 128 we fall back to the
    # resident variant (raised vmem limit); add a masked partial pixel tile if
    # that combination ever matters.

    if p_tile is None:
        # ------------- resident: whole spatial axis in VMEM ------------------
        per_sample = per_pixel_f32 * P
        bn = _pick_block_n(N, per_sample, budget, block_n)
        need = (2 * bn * c_pad * P * x_itemsize      # double-buffered input tile
                + 2 * bn * 8 * P * 4                 # double-buffered output tile
                + bn * per_sample                    # h1 / h2 / temps
                + (1 << 20))                         # weights + slack
        kern = functools.partial(_resident_kernel, use_sigmoid=use_sigmoid,
                                 block_n=bn, p_total=P,
                                 compute_dtype=compute_dtype)
        out = pl.pallas_call(
            kern,
            out_shape=jax.ShapeDtypeStruct((N, 1, P), jnp.float32),
            grid_spec=pltpu.PrefetchScalarGridSpec(
                num_scalar_prefetch=0,
                grid=(N // bn,),
                in_specs=[
                    pl.BlockSpec((bn, C_in, P), lambda i: (i, 0, 0)),   # x
                    pl.BlockSpec((F, C_in), lambda i: (0, 0)),          # w1
                    pl.BlockSpec((F, 1), lambda i: (0, 0)),             # b1
                    pl.BlockSpec((F2, F), lambda i: (0, 0)),            # w2
                    pl.BlockSpec((1, F2), lambda i: (0, 0)),            # w3
                    pl.BlockSpec(memory_space=pltpu.MemorySpace.SMEM),  # b3
                ],
                out_specs=pl.BlockSpec((bn, 1, P), lambda i: (i, 0, 0)),
            ),
            compiler_params=pltpu.CompilerParams(
                dimension_semantics=("parallel",),
                vmem_limit_bytes=_vmem_limit_bytes(phys_vmem, need)),
        )(x_ncp, w1, b1, w2, w3, b3)
    else:
        # ------------- P-tiled two-pass (large images / v7x) -----------------
        per_sample_tile = per_pixel_f32 * p_tile
        bn = _pick_block_n(N, per_sample_tile, budget, block_n)
        need = (2 * bn * c_pad * p_tile * x_itemsize
                + 2 * bn * 8 * p_tile * 4
                + bn * per_sample_tile
                + 2 * bn * F2 * 128 * 4              # sum / sumsq scratch
                + (1 << 20))
        kern = functools.partial(_tiled_kernel, use_sigmoid=use_sigmoid,
                                 block_n=bn, p_total=P,
                                 compute_dtype=compute_dtype)
        out = pl.pallas_call(
            kern,
            out_shape=jax.ShapeDtypeStruct((N, 1, P), jnp.float32),
            grid_spec=pltpu.PrefetchScalarGridSpec(
                num_scalar_prefetch=0,
                grid=(N // bn, 2, P // p_tile),
                in_specs=[
                    pl.BlockSpec((bn, C_in, p_tile),
                                 lambda i, ph, p: (i, 0, p)),           # x
                    pl.BlockSpec((F, C_in), lambda i, ph, p: (0, 0)),   # w1
                    pl.BlockSpec((F, 1), lambda i, ph, p: (0, 0)),      # b1
                    pl.BlockSpec((F2, F), lambda i, ph, p: (0, 0)),     # w2
                    pl.BlockSpec((1, F2), lambda i, ph, p: (0, 0)),     # w3
                    pl.BlockSpec(memory_space=pltpu.MemorySpace.SMEM),  # b3
                ],
                # Phase 0 never writes the output; mapping every phase-0 step
                # to pixel-block 0 means the untouched buffer is never flushed
                # and is simply overwritten by the first phase-1 step.
                out_specs=pl.BlockSpec((bn, 1, p_tile),
                                       lambda i, ph, p: (i, 0, p * ph)),
                scratch_shapes=[
                    pltpu.VMEM((bn, F2, 1), jnp.float32),   # sum(h2)
                    pltpu.VMEM((bn, F2, 1), jnp.float32),   # sum(h2*h2)
                ],
            ),
            compiler_params=pltpu.CompilerParams(
                dimension_semantics=("parallel", "arbitrary", "arbitrary"),
                vmem_limit_bytes=_vmem_limit_bytes(phys_vmem, need)),
        )(x_ncp, w1, b1, w2, w3, b3)

    # (N, 1, P) -> (N, 1, H, W): free reshape (PyTorch NCHW output).
    return out.reshape(N, 1, H, W)


# ----------------------------------------------------------------------------
# Params / reference / test.
# ----------------------------------------------------------------------------
def init_params(key, c_in, nb_feat):
    """Deterministic init. Conv weights stored PyTorch-style as (out, in)."""
    k1, k2, k3, k4, k5, k6 = jax.random.split(key, 6)
    f2 = nb_feat * 2
    w1 = 0.02 * jax.random.normal(k1, (nb_feat, c_in), jnp.float32)
    b1 = 0.02 * jax.random.normal(k2, (nb_feat, 1), jnp.float32)
    w2 = 0.02 * jax.random.normal(k3, (f2, nb_feat), jnp.float32)
    b2 = 0.02 * jax.random.normal(k4, (f2, 1), jnp.float32)
    w3 = 0.02 * jax.random.normal(k5, (1, f2), jnp.float32)
    b3 = 0.02 * jax.random.normal(k6, (1, 1), jnp.float32)
    return (w1, b1, w2, b2, w3, b3)


def _reference(x_nchw, params, use_sigmoid=True):
    """Pure-JAX f32 reference mirroring the PyTorch forward (keeps b2)."""
    w1, b1, w2, b2, w3, b3 = params
    N, C, H, W = x_nchw.shape
    x = x_nchw.reshape(N, C, H * W).astype(jnp.float32)
    h = jnp.einsum("fc,ncp->nfp", w1, x) + b1
    h = jnp.where(h > 0, h, 0.2 * h)
    h = jnp.einsum("gf,nfp->ngp", w2, h) + b2
    mean = jnp.mean(h, axis=2, keepdims=True)
    var = jnp.mean((h - mean) ** 2, axis=2, keepdims=True)
    h = (h - mean) * jax.lax.rsqrt(var + 1e-5)
    h = jnp.where(h > 0, h, 0.2 * h)
    h = jnp.einsum("of,nfp->nop", w3, h) + b3
    if use_sigmoid:
        h = jax.nn.sigmoid(h)
    return h.reshape(N, 1, H, W)


if __name__ == "__main__":
    # opt: ch_inp=2, ch_tar=2 -> C_in=4 ; nb_feature_init_D=32 ; use_sigmoid=True
    N, C_in, H, W = 2, 4, 16, 16
    NB_FEAT = 32

    key = jax.random.PRNGKey(0)
    kx, kp = jax.random.split(key)
    x = jax.random.normal(kx, (N, C_in, H, W), jnp.float32)
    params = init_params(kp, C_in, NB_FEAT)

    ref = _reference(x, params, use_sigmoid=True)

    # Resident (full-P-in-VMEM) path, f32 compute.
    out = jax.block_until_ready(pixel_discriminator(x, params, use_sigmoid=True))
    assert out.shape == (N, 1, H, W), out.shape
    assert jnp.allclose(out, ref, atol=3e-5, rtol=3e-5), "f32 resident mismatch"

    # P-tiled two-pass path (the large-image / v7x variant), forced at a small
    # shape so it is validated against the same reference.
    out_tiled = jax.block_until_ready(
        pixel_discriminator(x, params, use_sigmoid=True, p_tile=128))
    assert out_tiled.shape == (N, 1, H, W), out_tiled.shape
    assert jnp.allclose(out_tiled, ref, atol=3e-5, rtol=3e-5), "tiled mismatch"

    # Optional bf16 MXU-operand path (minor knob; the kernel is VALU-bound).
    out_bf16 = jax.block_until_ready(
        pixel_discriminator(x.astype(jnp.bfloat16), params, use_sigmoid=True,
                            compute_dtype=jnp.bfloat16))
    assert out_bf16.shape == (N, 1, H, W), out_bf16.shape
    assert jnp.allclose(out_bf16, ref, atol=2e-2), "bf16 mismatch"

    print("KERNEL_OK")
</pallas_src>

<mosaic_0001>
module attributes {stable_mosaic.version = 11 : i64} {
  func.func @_resident_kernel(%arg0: i32, %arg1: memref<1x4x256xf32, #tpu.memory_space<vmem>>, %arg2: memref<32x4xf32, #tpu.memory_space<vmem>>, %arg3: memref<32x1xf32, #tpu.memory_space<vmem>>, %arg4: memref<64x32xf32, #tpu.memory_space<vmem>>, %arg5: memref<1x64xf32, #tpu.memory_space<vmem>>, %arg6: memref<1x1xf32, #tpu.memory_space<smem>>, %arg7: memref<1x1x256xf32, #tpu.memory_space<vmem>>) attributes {dimension_semantics = [#tpu.dimension_semantics<parallel>], iteration_bounds = array<i64: 2>, scalar_prefetch = 0 : i64, scratch_operands = 0 : i64, tpu.core_type = #tpu.core_type<tc>, window_params = [{transform_indices = @transform_0, window_bounds = array<i64: 1, 4, 256>}, {pipeline_mode = #tpu.pipeline_mode<synchronous>, transform_indices = @transform_1, window_bounds = array<i64: 32, 4>}, {pipeline_mode = #tpu.pipeline_mode<synchronous>, transform_indices = @transform_2, window_bounds = array<i64: 32, 1>}, {pipeline_mode = #tpu.pipeline_mode<synchronous>, transform_indices = @transform_3, window_bounds = array<i64: 64, 32>}, {pipeline_mode = #tpu.pipeline_mode<synchronous>, transform_indices = @transform_4, window_bounds = array<i64: 1, 64>}, {transform_indices = @transform_5, window_bounds = array<i64: 1, 1>}, {transform_indices = @transform_6, window_bounds = array<i64: 1, 1, 256>}]} {
    %c0 = arith.constant 0 : index
    %c0_0 = arith.constant 0 : index
    %0 = vector.load %arg2[%c0, %c0_0] : memref<32x4xf32, #tpu.memory_space<vmem>>, vector<32x4xf32>
    %c0_1 = arith.constant 0 : index
    %c0_2 = arith.constant 0 : index
    %1 = vector.load %arg4[%c0_1, %c0_2] : memref<64x32xf32, #tpu.memory_space<vmem>>, vector<64x32xf32>
    %c0_3 = arith.constant 0 : index
    %c0_4 = arith.constant 0 : index
    %2 = vector.load %arg3[%c0_3, %c0_4] : memref<32x1xf32, #tpu.memory_space<vmem>>, vector<32x1xf32>
    %c0_5 = arith.constant 0 : index
    %c0_6 = arith.constant 0 : index
    %3 = vector.load %arg5[%c0_5, %c0_6] : memref<1x64xf32, #tpu.memory_space<vmem>>, vector<1x64xf32>
    %c0_7 = arith.constant 0 : index
    %c0_8 = arith.constant 0 : index
    %4 = memref.load %arg6[%c0_7, %c0_8] : memref<1x1xf32, #tpu.memory_space<smem>>
    %c0_9 = arith.constant 0 : index
    %c0_10 = arith.constant 0 : index
    %c0_11 = arith.constant 0 : index
    %5 = vector.load %arg1[%c0_9, %c0_10, %c0_11] : memref<1x4x256xf32, #tpu.memory_space<vmem>>, vector<1x4x256xf32>
    %6 = vector.shape_cast %5 : vector<1x4x256xf32> to vector<4x256xf32>
    %cst = arith.constant dense<0.000000e+00> : vector<32x256xf32>
    %7 = tpu.matmul %0, %6, %cst {dimension_numbers = #tpu.dot_dimension_numbers<[1], [0], [0], [1], [0, 0, 1, 1], [], []>} : vector<32x4xf32>, vector<4x256xf32>, vector<32x256xf32> -> vector<32x256xf32>
    %8 = vector.broadcast %2 : vector<32x1xf32> to vector<32x256xf32>
    %9 = arith.addf %7, %8 : vector<32x256xf32>
    %cst_12 = arith.constant 2.000000e-01 : f32
    %10 = vector.broadcast %cst_12 : f32 to vector<32x256xf32>
    %11 = arith.mulf %10, %9 : vector<32x256xf32>
    %12 = arith.maximumf %9, %11 : vector<32x256xf32>
    %cst_13 = arith.constant dense<0.000000e+00> : vector<64x256xf32>
    %13 = tpu.matmul %1, %12, %cst_13 {dimension_numbers = #tpu.dot_dimension_numbers<[1], [0], [0], [1], [0, 0, 1, 1], [], []>} : vector<64x32xf32>, vector<32x256xf32>, vector<64x256xf32> -> vector<64x256xf32>
    %cst_14 = arith.constant dense<0.000000e+00> : vector<64xf32>
    %14 = vector.multi_reduction <add>, %13, %cst_14 [1] : vector<64x256xf32> to vector<64xf32>
    %15 = vector.shape_cast %14 : vector<64xf32> to vector<64x1xf32>
    %cst_15 = arith.constant 3.906250e-03 : f32
    %16 = vector.broadcast %cst_15 : f32 to vector<64x1xf32>
    %17 = arith.mulf %15, %16 : vector<64x1xf32>
    %18 = arith.mulf %13, %13 : vector<64x256xf32>
    %cst_16 = arith.constant dense<0.000000e+00> : vector<64xf32>
    %19 = vector.multi_reduction <add>, %18, %cst_16 [1] : vector<64x256xf32> to vector<64xf32>
    %20 = vector.shape_cast %19 : vector<64xf32> to vector<64x1xf32>
    %cst_17 = arith.constant 3.906250e-03 : f32
    %21 = vector.broadcast %cst_17 : f32 to vector<64x1xf32>
    %22 = arith.mulf %20, %21 : vector<64x1xf32>
    %23 = arith.mulf %17, %17 : vector<64x1xf32>
    %24 = arith.subf %22, %23 : vector<64x1xf32>
    %cst_18 = arith.constant 0.000000e+00 : f32
    %25 = vector.broadcast %cst_18 : f32 to vector<64x1xf32>
    %26 = arith.maximumf %24, %25 : vector<64x1xf32>
    %cst_19 = arith.constant 9.99999974E-6 : f32
    %27 = vector.broadcast %cst_19 : f32 to vector<64x1xf32>
    %28 = arith.addf %26, %27 : vector<64x1xf32>
    %29 = math.rsqrt %28 : vector<64x1xf32>
    %30 = vector.broadcast %29 : vector<64x1xf32> to vector<64x256xf32>
    %31 = arith.mulf %13, %30 : vector<64x256xf32>
    %cst_20 = arith.constant 0.000000e+00 : f32
    %32 = vector.broadcast %cst_20 : f32 to vector<64x1xf32>
    %33 = arith.subf %32, %17 : vector<64x1xf32>
    %34 = arith.mulf %33, %29 : vector<64x1xf32>
    %35 = vector.broadcast %34 : vector<64x1xf32> to vector<64x256xf32>
    %36 = arith.addf %31, %35 : vector<64x256xf32>
    %cst_21 = arith.constant 2.000000e-01 : f32
    %37 = vector.broadcast %cst_21 : f32 to vector<64x256xf32>
    %38 = arith.mulf %37, %36 : vector<64x256xf32>
    %39 = arith.maximumf %36, %38 : vector<64x256xf32>
    %cst_22 = arith.constant dense<0.000000e+00> : vector<1x256xf32>
    %40 = tpu.matmul %3, %39, %cst_22 {dimension_numbers = #tpu.dot_dimension_numbers<[1], [0], [0], [1], [0, 0, 1, 1], [], []>} : vector<1x64xf32>, vector<64x256xf32>, vector<1x256xf32> -> vector<1x256xf32>
    %41 = vector.broadcast %4 : f32 to vector<1x256xf32>
    %42 = arith.addf %40, %41 : vector<1x256xf32>
    %43 = arith.negf %42 : vector<1x256xf32>
    %44 = math.exp %43 : vector<1x256xf32>
    %cst_23 = arith.constant 1.000000e+00 : f32
    %45 = vector.broadcast %cst_23 : f32 to vector<1x256xf32>
    %46 = arith.addf %45, %44 : vector<1x256xf32>
    %47 = arith.divf %45, %46 : vector<1x256xf32>
    %c0_24 = arith.constant 0 : index
    %c0_25 = arith.constant 0 : index
    %c0_26 = arith.constant 0 : index
    %48 = vector.load %arg7[%c0_24, %c0_25, %c0_26] : memref<1x1x256xf32, #tpu.memory_space<vmem>>, vector<1x1x256xf32>
    %49 = vector.shape_cast %48 : vector<1x1x256xf32> to vector<1x256xf32>
    %50 = vector.shape_cast %47 : vector<1x256xf32> to vector<1x1x256xf32>
    tpu.vector_store %arg7[%c0_24, %c0_25, %c0_26], %50 {strides = array<i32>} : memref<1x1x256xf32, #tpu.memory_space<vmem>>, vector<1x1x256xf32>,
    return
  }
  func.func @transform_0(%arg0: i32) -> (i32, i32, i32) {
    %c0_i32 = arith.constant 0 : i32
    %c0_i32_0 = arith.constant 0 : i32
    %c0_i32_1 = arith.constant 0 : i32
    return %arg0, %c0_i32, %c0_i32_0 : i32, i32, i32
  }
  func.func @transform_1(%arg0: i32) -> (i32, i32) {
    %c0_i32 = arith.constant 0 : i32
    %c0_i32_0 = arith.constant 0 : i32
    %c0_i32_1 = arith.constant 0 : i32
    return %c0_i32, %c0_i32_0 : i32, i32
  }
  func.func @transform_2(%arg0: i32) -> (i32, i32) {
    %c0_i32 = arith.constant 0 : i32
    %c0_i32_0 = arith.constant 0 : i32
    %c0_i32_1 = arith.constant 0 : i32
    return %c0_i32, %c0_i32_0 : i32, i32
  }
  func.func @transform_3(%arg0: i32) -> (i32, i32) {
    %c0_i32 = arith.constant 0 : i32
    %c0_i32_0 = arith.constant 0 : i32
    %c0_i32_1 = arith.constant 0 : i32
    return %c0_i32, %c0_i32_0 : i32, i32
  }
  func.func @transform_4(%arg0: i32) -> (i32, i32) {
    %c0_i32 = arith.constant 0 : i32
    %c0_i32_0 = arith.constant 0 : i32
    %c0_i32_1 = arith.constant 0 : i32
    return %c0_i32, %c0_i32_0 : i32, i32
  }
  func.func @transform_5(%arg0: i32) -> (i32, i32) {
    %c0_i32 = arith.constant 0 : i32
    %c0_i32_0 = arith.constant 0 : i32
    %c0_i32_1 = arith.constant 0 : i32
    return %c0_i32, %c0_i32_0 : i32, i32
  }
  func.func @transform_6(%arg0: i32) -> (i32, i32, i32) {
    %c0_i32 = arith.constant 0 : i32
    %c0_i32_0 = arith.constant 0 : i32
    %c0_i32_1 = arith.constant 0 : i32
    return %arg0, %c0_i32, %c0_i32_0 : i32, i32, i32
  }
}

</mosaic_0001>

<llo_original>
// kernel: tpu_custom_call.1
$region0: #{tpu_custom_call.1}
  #allocation0 [shape = 'u32[]', space=smem, size = 0x4, offset = 0x4, fixed_abs, tag = 'smem constant byte address 0x4 - core index']
  #allocation1 [shape = 'u32[144,128]{1,0:T(1,128)}', space=vmem, size = 0x12000, scoped, tag = 'internal scratch']
  #allocation2 [shape = 'f32[1,1]{1,0:T(1,128)S(6)}', space=smem, size = 0x200, scoped, tag = 'scoped memory for tpu_custom_call.1']
  %s0 = inlined_call_operand.vmem [shape: f32[2,4,256], index: 0, kind: input, shape index: {}]
  %s1 = inlined_call_operand.vmem [shape: f32[32,4], index: 1, kind: input, shape index: {}]
  %s2 = inlined_call_operand.vmem [shape: f32[32,1], index: 2, kind: input, shape index: {}]
  %s3 = inlined_call_operand.vmem [shape: f32[64,32], index: 3, kind: input, shape index: {}]
  %s4 = inlined_call_operand.vmem [shape: f32[1,64], index: 4, kind: input, shape index: {}]
  %s5 = inlined_call_operand.<no memory space> [shape: f32[1,1], index: 5, kind: input, shape index: {}]
  %s6 = inlined_call_operand.hbm [shape: f32[2,1,256], index: 6, kind: output, shape index: {}]
  %s7 = sld [smem:[#allocation0]]
  $region57: #{tpu_custom_call.1} parent=0
    _
  %s9 = ssub.s32 1, %s7
  %s10 = scalar_select 0, %s9, %s7
  %11 = sst [smem:[#allocation2]] %s5
  $region1: #{tpu_custom_call.1} parent=0
    #allocation3 [shape = 'u8[2048]{0}', space=vmem, size = 0x800, scoped, tag = 'output window, operand 0']
    #allocation4 [shape = 's32[2]{0}', space=sflag, size = 0x8, scoped, tag = 'scoped memory for tpu_custom_call.1']
    %12 = vsyncpa [#allocation4], 0
    %s13 = scalar_lea.sflag [#allocation4], 1
    %14 = vsyncpa %s13, 0
    loop: start=0, step=1, limit=4
    $region2: #{tpu_custom_call.1} parent=1 // loop_pre_header
      _
    $region3: #{tpu_custom_call.1} parent=1 // loop_header
      %s16 = sphi 0, %s20
      %p17 = scmp.ge.s32.totalorder %s16, 4
      %s26 = sphi 0, %s28
      %s29 = sphi 0, %s26
      %s30 = sphi 0, %s29
      %s46 = sphi 0, %s30
      %s50 = sphi 0, %s50
      %s52 = sphi 0, %s50
      %s53 = sphi 0, %s52
      %s67 = sphi 0, %s53
      %s71 = sphi 0, %s71
      %s73 = sphi 0, %s71
      %s74 = sphi 0, %s73
      %s88 = sphi 0, %s74
      %s92 = sphi 0, %s92
      %s94 = sphi 0, %s92
      %s95 = sphi 0, %s94
      %s109 = sphi 0, %s95
      %s113 = sphi 0, %s113
      %s115 = sphi 0, %s113
      %s116 = sphi 0, %s115
      %s130 = sphi 0, %s116
      %s134 = sphi 0, %s134
      %s136 = sphi 0, %s134
      %s137 = sphi 0, %s136
      %s151 = sphi 0, %s137
      %s157 = sphi 0, %s159
      %s160 = sphi 0, %s157
      %s161 = sphi 0, %s160
      %s177 = sphi 0, %s161
    $region4: #{tpu_custom_call.1} parent=1 // loop_header_branch
      %19 = sbr.rel (%p17) target = $region8
    $region5: #{tpu_custom_call.1} parent=1 // loop_body
      %s21 = ssub.s32 %s16, 1
      %s22 = ssub.s32 %s16, 2
      %s23 = sadd.s32 %s16, 1
      %s24 = ssub.s32 %s16, %s23
      %p25 = scmp.eq.s32.totalorder %s24, 0
      %s27 = sadd.s32 %s26, 1
      %s28 = scalar_select %p25, %s26, %s27
      %p31 = pneg %p25
      %p32 = scmp.eq.s32.totalorder %s16, 1
      %p33 = por %p31, %p32
      %p34 = scmp.ne.s32.totalorder %s26, %s29
      %p35 = scmp.eq.s32.totalorder %s16, 0
      %p36 = por %p34, %p35
      %p37 = scmp.ne.s32.totalorder %s26, %s29
      %p38 = scmp.eq.s32.totalorder %s21, 1
      %p39 = por %p37, %p38
      %p40 = scmp.ne.s32.totalorder %s29, %s30
      %p41 = scmp.eq.s32.totalorder %s21, 0
      %p42 = por %p40, %p41
      %p43 = scmp.ne.s32.totalorder %s29, %s30
      %p44 = scmp.eq.s32.totalorder %s22, 1
      %p45 = por %p43, %p44
      %p47 = scmp.ne.s32.totalorder %s30, %s46
      %p48 = scmp.eq.s32.totalorder %s22, 0
      %p49 = por %p47, %p48
      %s51 = sadd.s32 %s50, 1
      %p54 = scmp.eq.s32.totalorder %s16, 1
      %p55 = scmp.ne.s32.totalorder %s50, %s52
      %p56 = scmp.eq.s32.totalorder %s16, 0
      %p57 = por %p55, %p56
      %p58 = scmp.ne.s32.totalorder %s50, %s52
      %p59 = scmp.eq.s32.totalorder %s21, 1
      %p60 = por %p58, %p59
      %p61 = scmp.ne.s32.totalorder %s52, %s53
      %p62 = scmp.eq.s32.totalorder %s21, 0
      %p63 = por %p61, %p62
      %p64 = scmp.ne.s32.totalorder %s52, %s53
      %p65 = scmp.eq.s32.totalorder %s22, 1
      %p66 = por %p64, %p65
      %p68 = scmp.ne.s32.totalorder %s53, %s67
      %p69 = scmp.eq.s32.totalorder %s22, 0
      %p70 = por %p68, %p69
      %s72 = sadd.s32 %s71, 1
      %p75 = scmp.eq.s32.totalorder %s16, 1
      %p76 = scmp.ne.s32.totalorder %s71, %s73
      %p77 = scmp.eq.s32.totalorder %s16, 0
      %p78 = por %p76, %p77
      %p79 = scmp.ne.s32.totalorder %s71, %s73
      %p80 = scmp.eq.s32.totalorder %s21, 1
      %p81 = por %p79, %p80
      %p82 = scmp.ne.s32.totalorder %s73, %s74
      %p83 = scmp.eq.s32.totalorder %s21, 0
      %p84 = por %p82, %p83
      %p85 = scmp.ne.s32.totalorder %s73, %s74
      %p86 = scmp.eq.s32.totalorder %s22, 1
      %p87 = por %p85, %p86
      %p89 = scmp.ne.s32.totalorder %s74, %s88
      %p90 = scmp.eq.s32.totalorder %s22, 0
      %p91 = por %p89, %p90
      %s93 = sadd.s32 %s92, 1
      %p96 = scmp.eq.s32.totalorder %s16, 1
      %p97 = scmp.ne.s32.totalorder %s92, %s94
      %p98 = scmp.eq.s32.totalorder %s16, 0
      %p99 = por %p97, %p98
      %p100 = scmp.ne.s32.totalorder %s92, %s94
      %p101 = scmp.eq.s32.totalorder %s21, 1
      %p102 = por %p100, %p101
      %p103 = scmp.ne.s32.totalorder %s94, %s95
      %p104 = scmp.eq.s32.totalorder %s21, 0
      %p105 = por %p103, %p104
      %p106 = scmp.ne.s32.totalorder %s94, %s95
      %p107 = scmp.eq.s32.totalorder %s22, 1
      %p108 = por %p106, %p107
      %p110 = scmp.ne.s32.totalorder %s95, %s109
      %p111 = scmp.eq.s32.totalorder %s22, 0
      %p112 = por %p110, %p111
      %s114 = sadd.s32 %s113, 1
      %p117 = scmp.eq.s32.totalorder %s16, 1
      %p118 = scmp.ne.s32.totalorder %s113, %s115
      %p119 = scmp.eq.s32.totalorder %s16, 0
      %p120 = por %p118, %p119
      %p121 = scmp.ne.s32.totalorder %s113, %s115
      %p122 = scmp.eq.s32.totalorder %s21, 1
      %p123 = por %p121, %p122
      %p124 = scmp.ne.s32.totalorder %s115, %s116
      %p125 = scmp.eq.s32.totalorder %s21, 0
      %p126 = por %p124, %p125
      %p127 = scmp.ne.s32.totalorder %s115, %s116
      %p128 = scmp.eq.s32.totalorder %s22, 1
      %p129 = por %p127, %p128
      %p131 = scmp.ne.s32.totalorder %s116, %s130
      %p132 = scmp.eq.s32.totalorder %s22, 0
      %p133 = por %p131, %p132
      %s135 = sadd.s32 %s134, 1
      %p138 = scmp.eq.s32.totalorder %s16, 1
      %p139 = scmp.ne.s32.totalorder %s134, %s136
      %p140 = scmp.eq.s32.totalorder %s16, 0
      %p141 = por %p139, %p140
      %p142 = scmp.ne.s32.totalorder %s134, %s136
      %p143 = scmp.eq.s32.totalorder %s21, 1
      %p144 = por %p142, %p143
      %p145 = scmp.ne.s32.totalorder %s136, %s137
      %p146 = scmp.eq.s32.totalorder %s21, 0
      %p147 = por %p145, %p146
      %p148 = scmp.ne.s32.totalorder %s136, %s137
      %p149 = scmp.eq.s32.totalorder %s22, 1
      %p150 = por %p148, %p149
      %p152 = scmp.ne.s32.totalorder %s137, %s151
      %p153 = scmp.eq.s32.totalorder %s22, 0
      %p154 = por %p152, %p153
      %s155 = ssub.s32 %s16, %s23
      %p156 = scmp.eq.s32.totalorder %s155, 0
      %s158 = sadd.s32 %s157, 1
      %s159 = scalar_select %p156, %s157, %s158
      %p162 = pneg %p156
      %p163 = scmp.eq.s32.totalorder %s16, 1
      %p164 = por %p162, %p163
      %p165 = scmp.ne.s32.totalorder %s157, %s160
      %p166 = scmp.eq.s32.totalorder %s16, 0
      %p167 = por %p165, %p166
      %p168 = scmp.ne.s32.totalorder %s157, %s160
      %p169 = scmp.eq.s32.totalorder %s21, 1
      %p170 = por %p168, %p169
      %p171 = scmp.ne.s32.totalorder %s160, %s161
      %p172 = scmp.eq.s32.totalorder %s21, 0
      %p173 = por %p171, %p172
      %p174 = scmp.ne.s32.totalorder %s160, %s161
      %p175 = scmp.eq.s32.totalorder %s22, 1
      %p176 = por %p174, %p175
      %p178 = scmp.ne.s32.totalorder %s161, %s177
      %p179 = scmp.eq.s32.totalorder %s22, 0
      %p180 = por %p178, %p179
      %p181 = scmp.le.s32.totalorder 1, %s16
      %p182 = scmp.lt.s32.totalorder %s16, 3
      %p183 = pnand %p181, %p182
      %p184 = pneg %p183
      // Predicated region
      $region9: #{tpu_custom_call.1} parent=5 // pred_check
        _
      $region10: #{tpu_custom_call.1} parent=5 // pred_check_branch
        %186 = sbr.rel (%p183) target = $region12
      $region11: #{tpu_custom_call.1} parent=5 // pred_region
        %s187 = ssub.s32 %s16, 1
        // Predicated region
        $region13: #{tpu_custom_call.1} parent=11 // pred_check
          %p188 = pneg %p63
        $region14: #{tpu_custom_call.1} parent=11 // pred_check_branch
          %190 = sbr.rel (%p188) target = $region16
        $region15: #{tpu_custom_call.1} parent=11 // pred_region
          _
        $region16: #{tpu_custom_call.1} parent=11 // pred_fallthru
          _
        // Predicated region
        $region17: #{tpu_custom_call.1} parent=11 // pred_check
          %p191 = pneg %p84
        $region18: #{tpu_custom_call.1} parent=11 // pred_check_branch
          %193 = sbr.rel (%p191) target = $region20
        $region19: #{tpu_custom_call.1} parent=11 // pred_region
          _
        $region20: #{tpu_custom_call.1} parent=11 // pred_fallthru
          _
        // Predicated region
        $region21: #{tpu_custom_call.1} parent=11 // pred_check
          %p194 = pneg %p105
        $region22: #{tpu_custom_call.1} parent=11 // pred_check_branch
          %196 = sbr.rel (%p194) target = $region24
        $region23: #{tpu_custom_call.1} parent=11 // pred_region
          _
        $region24: #{tpu_custom_call.1} parent=11 // pred_fallthru
          _
        // Predicated region
        $region25: #{tpu_custom_call.1} parent=11 // pred_check
          %p197 = pneg %p126
        $region26: #{tpu_custom_call.1} parent=11 // pred_check_branch
          %199 = sbr.rel (%p197) target = $region28
        $region27: #{tpu_custom_call.1} parent=11 // pred_region
          _
        $region28: #{tpu_custom_call.1} parent=11 // pred_fallthru
          _
        // Predicated region
        $region29: #{tpu_custom_call.1} parent=11 // pred_check
          %p200 = pneg %p147
        $region30: #{tpu_custom_call.1} parent=11 // pred_check_branch
          %202 = sbr.rel (%p200) target = $region32
        $region31: #{tpu_custom_call.1} parent=11 // pred_region
          _
        $region32: #{tpu_custom_call.1} parent=11 // pred_fallthru
          _
      $region12: #{tpu_custom_call.1} parent=5 // pred_fallthru
        _
      %p203 = scmp.lt.s32.totalorder %s16, 2
      // Predicated region
      $region33: #{tpu_custom_call.1} parent=5 // pred_check
        %p204 = pneg %p203
      $region34: #{tpu_custom_call.1} parent=5 // pred_check_branch
        %206 = sbr.rel (%p204) target = $region36
      $region35: #{tpu_custom_call.1} parent=5 // pred_region
        // Predicated region
        $region37: #{tpu_custom_call.1} parent=35 // pred_check
          %p207 = pneg %p36
        $region38: #{tpu_custom_call.1} parent=35 // pred_check_branch
          %209 = sbr.rel (%p207) target = $region40
        $region39: #{tpu_custom_call.1} parent=35 // pred_region
          %p210 = scmp.lt.s32.totalorder %s16, 1
          %s211 = scalar_select %p210, %s16, 1
          %s212 = smul.addr %s211, 2
          %s213 = smul.addr %s212, 4
          %s214 = scalar_lea.vmem %s0, %s213
        $region40: #{tpu_custom_call.1} parent=35 // pred_fallthru
          _
      $region36: #{tpu_custom_call.1} parent=5 // pred_fallthru
        _
      %p215 = scmp.le.s32.totalorder 1, %s16
      %p216 = scmp.lt.s32.totalorder %s16, 3
      %p217 = pnand %p215, %p216
      %p218 = pneg %p217
      // Predicated region
      $region41: #{tpu_custom_call.1} parent=5 // pred_check
        _
      $region42: #{tpu_custom_call.1} parent=5 // pred_check_branch
        %220 = sbr.rel (%p217) target = $region44
      $region43: #{tpu_custom_call.1} parent=5 // pred_region
        %s221 = ssub.s32 %s16, 1
        %p222 = scmp.lt.s32.totalorder %s21, 1
        %s223 = scalar_select %p222, %s21, 1
        %s224 = smul.addr %s223, 2
        %s225 = smul.addr %s224, 4
        %s226 = scalar_lea.vmem %s0, %s225
        %p227 = pneg %p42
        %p228 = pneg %p39
        %p229 = pneg %p63
        %p230 = pneg %p60
        %p231 = pneg %p84
        %p232 = pneg %p81
        %p233 = pneg %p105
        %p234 = pneg %p102
        %p235 = pneg %p126
        %p236 = pneg %p123
        %p237 = pneg %p147
        %p238 = pneg %p144
        %p239 = pneg %p173
        %p240 = pneg %p170
        %s241 = sand.u32 %s160, 1
        %s242 = scalar_lea.sflag [#allocation4], %s241
        %s243 = sand.u32 %s160, 1
        %s244 = smul.addr %s243, 2
        %s245 = scalar_lea.vmem [#allocation3], %s244
        %p246 = scmp.lt.s32.totalorder %s21, 1
        %s247 = scalar_select %p246, %s21, 1
        %s248 = smul.addr %s247, 2
        %s249 = smul.addr %s248, 4
        %s250 = scalar_lea.vmem %s0, %s249
        %v251 = vld [vmem:[%s1] sm:$0xff]
        %v252 = vld [vmem:[%s1 + $0x8] sm:$0xff]
        %v253 = vld [vmem:[%s1 + $0x10] sm:$0xff]
        %v254 = vld [vmem:[%s1 + $0x18] sm:$0xff]
        %v255 = vld [vmem:[%s3] sm:$0xff]
        %v256 = vld [vmem:[%s3 + $0x8] sm:$0xff]
        %v257 = vld [vmem:[%s3 + $0x10] sm:$0xff]
        %v258 = vld [vmem:[%s3 + $0x18] sm:$0xff]
        %v259 = vld [vmem:[%s3 + $0x20] sm:$0xff]
        %v260 = vld [vmem:[%s3 + $0x28] sm:$0xff]
        %v261 = vld [vmem:[%s3 + $0x30] sm:$0xff]
        %v262 = vld [vmem:[%s3 + $0x38] sm:$0xff]
        %v263 = vld [vmem:[%s2] sm:$0xff]
        %v264 = vld [vmem:[%s2 + $0x8] sm:$0xff]
        %v265 = vld [vmem:[%s2 + $0x10] sm:$0xff]
        %v266 = vld [vmem:[%s2 + $0x18] sm:$0xff]
        %v267 = vld [vmem:[%s4] sm:$0x1]
        %s268 = sld [smem:[#allocation2]]
        %v269 = vld [vmem:[%s250] sm:$0xff]
        %271 = vset.pattern.permute.xlu0 0
        %272 = vperm.xlu0 %271, %v263
        %v273 = vpop.permute.xlu0 %272
        %276 = vset.pattern.permute.xlu0 0
        %277 = vperm.xlu0 %276, %v264
        %v278 = vpop.permute.xlu0 %277
        %281 = vset.pattern.permute.xlu0 0
        %282 = vperm.xlu0 %281, %v265
        %v283 = vpop.permute.xlu0 %282
        %286 = vset.pattern.permute.xlu0 0
        %287 = vperm.xlu0 %286, %v266
        %v288 = vpop.permute.xlu0 %287
        %v291 = vcombine.high %v269, %v269
        %vm292 = vcmask 31744
        %v294 = vsel %vm292, %v251, 0
        %v297 = vsel %vm292, %v252, 0
        %v300 = vsel %vm292, %v253, 0
        %v303 = vsel %vm292, %v254, 0
        %vm305 = vcmask 1043456
        %v306 = vsel %vm305, %v269, 0
        %v308 = vsel %vm305, %v291, 0
        %310 = vmatprep.subr.mxu0 %v308
        %311 = vmatpush1.msra.mxu0 %v306
        %312 = vmatprep.subr.mxu0 0.0
        %313 = vmatpush1.msra.mxu0 0.0
        %314 = vmatprep.subr.mxu0 0.0
        %315 = vmatpush1.msra.mxu0 0.0
        %316 = vmatprep.subr.mxu0 0.0
        %317 = vmatpush1.msra.mxu0 0.0
        %318 = vmatprep.subr.mxu0 0.0
        %319 = vmatpush1.msra.mxu0 0.0
        %320 = vmatprep.subr.mxu0 0.0
        %321 = vmatpush1.msra.mxu0 0.0
        %322 = vmatprep.subr.mxu0 0.0
        %323 = vmatpush1.msra.mxu0 0.0
        %324 = vmatprep.subr.mxu0 0.0
        %325 = vmatpush1.msra.mxu0 0.0
        %326 = vmatprep.subr.mxu0 0.0
        %327 = vmatpush1.msra.mxu0 0.0
        %328 = vmatprep.subr.mxu0 0.0
        %329 = vmatpush1.msra.mxu0 0.0
        %330 = vmatprep.subr.mxu0 0.0
        %331 = vmatpush1.msra.mxu0 0.0
        %332 = vmatprep.subr.mxu0 0.0
        %333 = vmatpush1.msra.mxu0 0.0
        %334 = vmatprep.subr.mxu0 0.0
        %335 = vmatpush1.msra.mxu0 0.0
        %336 = vmatprep.subr.mxu0 0.0
        %337 = vmatpush1.msra.mxu0 0.0
        %338 = vmatprep.subr.mxu0 0.0
        %339 = vmatpush1.msra.mxu0 0.0
        %340 = vmatprep.subr.mxu0 0.0
        %341 = vmatpush1.msra.mxu0 0.0
        %342 = vmatprep.subr.mxu0 0.0
        %343 = vmatpush1.msra.mxu0 0.0
        %344 = vmatprep.subr.mxu0 0.0
        %345 = vmatpush1.msra.mxu0 0.0
        %346 = vmatprep.subr.mxu0 0.0
        %347 = vmatpush1.msra.mxu0 0.0
        %348 = vmatprep.subr.mxu0 0.0
        %349 = vmatpush1.msra.mxu0 0.0
        %350 = vmatprep.subr.mxu0 0.0
        %351 = vmatpush1.msra.mxu0 0.0
        %352 = vmatprep.subr.mxu0 0.0
        %353 = vmatpush1.msra.mxu0 0.0
        %354 = vmatprep.subr.mxu0 0.0
        %355 = vmatpush1.msra.mxu0 0.0
        %356 = vmatprep.subr.mxu0 0.0
        %357 = vmatpush1.msra.mxu0 0.0
        %358 = vmatprep.subr.mxu0 0.0
        %359 = vmatpush1.msra.mxu0 0.0
        %360 = vmatprep.subr.mxu0 0.0
        %361 = vmatpush1.msra.mxu0 0.0
        %362 = vmatprep.subr.mxu0 0.0
        %363 = vmatpush1.msra.mxu0 0.0
        %364 = vmatprep.subr.mxu0 0.0
        %365 = vmatpush1.msra.mxu0 0.0
        %366 = vmatprep.subr.mxu0 0.0
        %367 = vmatpush1.msra.mxu0 0.0
        %368 = vmatprep.subr.mxu0 0.0
        %369 = vmatpush1.msra.mxu0 0.0
        %370 = vmatprep.subr.mxu0 0.0
        %371 = vmatpush1.msra.mxu0 0.0
        %372 = vmatprep.subr.mxu0 0.0
        %373 = vmatpush1.msra.mxu0 0.0
        %374 = vmatprep.mubr.f32.mxu0 0.0
        %375 = vmatmul.mubr.f32.gmra.mrb[0].mxu0 %v294
        %v376 = vpop.f32.mrb[0].mxu0
        %v377 = vadd.f32 %v273, %v376
        %v378 = vpop.f32.mrb[0].mxu0
        %v379 = vadd.f32 %v273, %v378
        %380 = vmatprep.mubr.f32.mxu0 0.0
        %381 = vmatmul.mubr.f32.gmra.mrb[0].mxu0 %v297
        %v382 = vpop.f32.mrb[0].mxu0
        %v383 = vadd.f32 %v278, %v382
        %v384 = vpop.f32.mrb[0].mxu0
        %v385 = vadd.f32 %v278, %v384
        %386 = vmatprep.mubr.f32.mxu0 0.0
        %387 = vmatmul.mubr.f32.gmra.mrb[0].mxu0 %v300
        %v388 = vpop.f32.mrb[0].mxu0
        %v389 = vadd.f32 %v283, %v388
        %v390 = vpop.f32.mrb[0].mxu0
        %v391 = vadd.f32 %v283, %v390
        %392 = vmatprep.mubr.f32.mxu0 0.0
        %393 = vmatmul.mubr.f32.gmra.mrb[0].mxu0 %v303
        %v394 = vpop.f32.mrb[0].mxu0
        %v395 = vadd.f32 %v288, %v394
        %v396 = vpop.f32.mrb[0].mxu0
        %v397 = vadd.f32 %v288, %v396
        %398 = vdwg.mxu0
        %v399 = vmul.f32 %v377, 0.2
        %v400 = vmul.f32 %v379, 0.2
        %v401 = vmul.f32 %v383, 0.2
        %v402 = vmul.f32 %v385, 0.2
        %v403 = vmul.f32 %v389, 0.2
        %v404 = vmul.f32 %v391, 0.2
        %v405 = vmul.f32 %v395, 0.2
        %v406 = vmul.f32 %v397, 0.2
        %v407 = vmax.f32 %v377, %v399
        %v408 = vmax.f32 %v379, %v400
        %v409 = vmax.f32 %v383, %v401
        %v410 = vmax.f32 %v385, %v402
        %v411 = vmax.f32 %v389, %v403
        %v412 = vmax.f32 %v391, %v404
        %v413 = vmax.f32 %v395, %v405
        %v414 = vmax.f32 %v397, %v406
        %vm415 = vcmask 261120
        %v417 = vsel %vm415, %v255, 0
        %v420 = vsel %vm415, %v256, 0
        %v423 = vsel %vm415, %v257, 0
        %v426 = vsel %vm415, %v258, 0
        %v429 = vsel %vm415, %v259, 0
        %v432 = vsel %vm415, %v260, 0
        %v435 = vsel %vm415, %v261, 0
        %v438 = vsel %vm415, %v262, 0
        %440 = vmatprep.subr.mxu0 %v408
        %441 = vmatpush1.msra.mxu0 %v407
        %442 = vmatprep.subr.mxu0 %v410
        %443 = vmatpush1.msra.mxu0 %v409
        %444 = vmatprep.subr.mxu0 %v412
        %445 = vmatpush1.msra.mxu0 %v411
        %446 = vmatprep.subr.mxu0 %v414
        %447 = vmatpush1.msra.mxu0 %v413
        %448 = vmatprep.subr.mxu0 0.0
        %449 = vmatpush1.msra.mxu0 0.0
        %450 = vmatprep.subr.mxu0 0.0
        %451 = vmatpush1.msra.mxu0 0.0
        %452 = vmatprep.subr.mxu0 0.0
        %453 = vmatpush1.msra.mxu0 0.0
        %454 = vmatprep.subr.mxu0 0.0
        %455 = vmatpush1.msra.mxu0 0.0
        %456 = vmatprep.subr.mxu0 0.0
        %457 = vmatpush1.msra.mxu0 0.0
        %458 = vmatprep.subr.mxu0 0.0
        %459 = vmatpush1.msra.mxu0 0.0
        %460 = vmatprep.subr.mxu0 0.0
        %461 = vmatpush1.msra.mxu0 0.0
        %462 = vmatprep.subr.mxu0 0.0
        %463 = vmatpush1.msra.mxu0 0.0
        %464 = vmatprep.subr.mxu0 0.0
        %465 = vmatpush1.msra.mxu0 0.0
        %466 = vmatprep.subr.mxu0 0.0
        %467 = vmatpush1.msra.mxu0 0.0
        %468 = vmatprep.subr.mxu0 0.0
        %469 = vmatpush1.msra.mxu0 0.0
        %470 = vmatprep.subr.mxu0 0.0
        %471 = vmatpush1.msra.mxu0 0.0
        %472 = vmatprep.subr.mxu0 0.0
        %473 = vmatpush1.msra.mxu0 0.0
        %474 = vmatprep.subr.mxu0 0.0
        %475 = vmatpush1.msra.mxu0 0.0
        %476 = vmatprep.subr.mxu0 0.0
        %477 = vmatpush1.msra.mxu0 0.0
        %478 = vmatprep.subr.mxu0 0.0
        %479 = vmatpush1.msra.mxu0 0.0
        %480 = vmatprep.subr.mxu0 0.0
        %481 = vmatpush1.msra.mxu0 0.0
        %482 = vmatprep.subr.mxu0 0.0
        %483 = vmatpush1.msra.mxu0 0.0
        %484 = vmatprep.subr.mxu0 0.0
        %485 = vmatpush1.msra.mxu0 0.0
        %486 = vmatprep.subr.mxu0 0.0
        %487 = vmatpush1.msra.mxu0 0.0
        %488 = vmatprep.subr.mxu0 0.0
        %489 = vmatpush1.msra.mxu0 0.0
        %490 = vmatprep.subr.mxu0 0.0
        %491 = vmatpush1.msra.mxu0 0.0
        %492 = vmatprep.subr.mxu0 0.0
        %493 = vmatpush1.msra.mxu0 0.0
        %494 = vmatprep.subr.mxu0 0.0
        %495 = vmatpush1.msra.mxu0 0.0
        %496 = vmatprep.subr.mxu0 0.0
        %497 = vmatpush1.msra.mxu0 0.0
        %498 = vmatprep.subr.mxu0 0.0
        %499 = vmatpush1.msra.mxu0 0.0
        %500 = vmatprep.subr.mxu0 0.0
        %501 = vmatpush1.msra.mxu0 0.0
        %502 = vmatprep.subr.mxu0 0.0
        %503 = vmatpush1.msra.mxu0 0.0
        %504 = vmatprep.mubr.f32.mxu0 0.0
        %505 = vmatmul.mubr.f32.gmra.mrb[0].mxu0 %v417
        %v506 = vpop.f32.mrb[0].mxu0
        %v507 = vadd.f32 0.0, %v506
        %v508 = vpop.f32.mrb[0].mxu0
        %v509 = vadd.f32 0.0, %v508
        %510 = vmatprep.mubr.f32.mxu0 0.0
        %511 = vmatmul.mubr.f32.gmra.mrb[0].mxu0 %v420
        %v512 = vpop.f32.mrb[0].mxu0
        %v513 = vadd.f32 0.0, %v512
        %v514 = vpop.f32.mrb[0].mxu0
        %v515 = vadd.f32 0.0, %v514
        %516 = vmatprep.mubr.f32.mxu0 0.0
        %517 = vmatmul.mubr.f32.gmra.mrb[0].mxu0 %v423
        %v518 = vpop.f32.mrb[0].mxu0
        %v519 = vadd.f32 0.0, %v518
        %v520 = vpop.f32.mrb[0].mxu0
        %v521 = vadd.f32 0.0, %v520
        %522 = vmatprep.mubr.f32.mxu0 0.0
        %523 = vmatmul.mubr.f32.gmra.mrb[0].mxu0 %v426
        %v524 = vpop.f32.mrb[0].mxu0
        %v525 = vadd.f32 0.0, %v524
        %v526 = vpop.f32.mrb[0].mxu0
        %v527 = vadd.f32 0.0, %v526
        %528 = vmatprep.mubr.f32.mxu0 0.0
        %529 = vmatmul.mubr.f32.gmra.mrb[0].mxu0 %v429
        %v530 = vpop.f32.mrb[0].mxu0
        %v531 = vadd.f32 0.0, %v530
        %v532 = vpop.f32.mrb[0].mxu0
        %v533 = vadd.f32 0.0, %v532
        %534 = vmatprep.mubr.f32.mxu0 0.0
        %535 = vmatmul.mubr.f32.gmra.mrb[0].mxu0 %v432
        %v536 = vpop.f32.mrb[0].mxu0
        %v537 = vadd.f32 0.0, %v536
        %v538 = vpop.f32.mrb[0].mxu0
        %v539 = vadd.f32 0.0, %v538
        %540 = vmatprep.mubr.f32.mxu0 0.0
        %541 = vmatmul.mubr.f32.gmra.mrb[0].mxu0 %v435
        %v542 = vpop.f32.mrb[0].mxu0
        %v543 = vadd.f32 0.0, %v542
        %v544 = vpop.f32.mrb[0].mxu0
        %v545 = vadd.f32 0.0, %v544
        %546 = vmatprep.mubr.f32.mxu0 0.0
        %547 = vmatmul.mubr.f32.gmra.mrb[0].mxu0 %v438
        %v548 = vpop.f32.mrb[0].mxu0
        %v549 = vadd.f32 0.0, %v548
        %v550 = vpop.f32.mrb[0].mxu0
        %v551 = vadd.f32 0.0, %v550
        %552 = vdwg.mxu0
        %v553 = vadd.f32 %v507, %v509
        %554 = vadd.xlane.f32.xlu0 %v553
        %v555 = vpop.xlane.xlu0 %554
        %v556 = vadd.f32 %v513, %v515
        %557 = vadd.xlane.f32.xlu0 %v556
        %v558 = vpop.xlane.xlu0 %557
        %v559 = vadd.f32 %v519, %v521
        %560 = vadd.xlane.f32.xlu0 %v559
        %v561 = vpop.xlane.xlu0 %560
        %v562 = vadd.f32 %v525, %v527
        %563 = vadd.xlane.f32.xlu0 %v562
        %v564 = vpop.xlane.xlu0 %563
        %v565 = vadd.f32 %v531, %v533
        %566 = vadd.xlane.f32.xlu0 %v565
        %v567 = vpop.xlane.xlu0 %566
        %v568 = vadd.f32 %v537, %v539
        %569 = vadd.xlane.f32.xlu0 %v568
        %v570 = vpop.xlane.xlu0 %569
        %v571 = vadd.f32 %v543, %v545
        %572 = vadd.xlane.f32.xlu0 %v571
        %v573 = vpop.xlane.xlu0 %572
        %v574 = vadd.f32 %v549, %v551
        %575 = vadd.xlane.f32.xlu0 %v574
        %v576 = vpop.xlane.xlu0 %575
        %v577 = vmul.f32 %v555, 0.00390625
        %v578 = vmul.f32 %v558, 0.00390625
        %v579 = vmul.f32 %v561, 0.00390625
        %v580 = vmul.f32 %v564, 0.00390625
        %v581 = vmul.f32 %v567, 0.00390625
        %v582 = vmul.f32 %v570, 0.00390625
        %v583 = vmul.f32 %v573, 0.00390625
        %v584 = vmul.f32 %v576, 0.00390625
        %v585 = vmul.f32 %v507, %v507
        %v586 = vmul.f32 %v509, %v509
        %v587 = vmul.f32 %v513, %v513
        %v588 = vmul.f32 %v515, %v515
        %v589 = vmul.f32 %v519, %v519
        %v590 = vmul.f32 %v521, %v521
        %v591 = vmul.f32 %v525, %v525
        %v592 = vmul.f32 %v527, %v527
        %v593 = vmul.f32 %v531, %v531
        %v594 = vmul.f32 %v533, %v533
        %v595 = vmul.f32 %v537, %v537
        %v596 = vmul.f32 %v539, %v539
        %v597 = vmul.f32 %v543, %v543
        %v598 = vmul.f32 %v545, %v545
        %v599 = vmul.f32 %v549, %v549
        %v600 = vmul.f32 %v551, %v551
        %v601 = vadd.f32 %v585, %v586
        %602 = vadd.xlane.f32.xlu0 %v601
        %v603 = vpop.xlane.xlu0 %602
        %v604 = vadd.f32 %v587, %v588
        %605 = vadd.xlane.f32.xlu0 %v604
        %v606 = vpop.xlane.xlu0 %605
        %v607 = vadd.f32 %v589, %v590
        %608 = vadd.xlane.f32.xlu0 %v607
        %v609 = vpop.xlane.xlu0 %608
        %v610 = vadd.f32 %v591, %v592
        %611 = vadd.xlane.f32.xlu0 %v610
        %v612 = vpop.xlane.xlu0 %611
        %v613 = vadd.f32 %v593, %v594
        %614 = vadd.xlane.f32.xlu0 %v613
        %v615 = vpop.xlane.xlu0 %614
        %v616 = vadd.f32 %v595, %v596
        %617 = vadd.xlane.f32.xlu0 %v616
        %v618 = vpop.xlane.xlu0 %617
        %v619 = vadd.f32 %v597, %v598
        %620 = vadd.xlane.f32.xlu0 %v619
        %v621 = vpop.xlane.xlu0 %620
        %v622 = vadd.f32 %v599, %v600
        %623 = vadd.xlane.f32.xlu0 %v622
        %v624 = vpop.xlane.xlu0 %623
        %v625 = vmul.f32 %v603, 0.00390625
        %v626 = vmul.f32 %v606, 0.00390625
        %v627 = vmul.f32 %v609, 0.00390625
        %v628 = vmul.f32 %v612, 0.00390625
        %v629 = vmul.f32 %v615, 0.00390625
        %v630 = vmul.f32 %v618, 0.00390625
        %v631 = vmul.f32 %v621, 0.00390625
        %v632 = vmul.f32 %v624, 0.00390625
        %v633 = vmul.f32 %v577, %v577
        %v634 = vmul.f32 %v578, %v578
        %v635 = vmul.f32 %v579, %v579
        %v636 = vmul.f32 %v580, %v580
        %v637 = vmul.f32 %v581, %v581
        %v638 = vmul.f32 %v582, %v582
        %v639 = vmul.f32 %v583, %v583
        %v640 = vmul.f32 %v584, %v584
        %v641 = vsub.f32 %v625, %v633
        %v642 = vsub.f32 %v626, %v634
        %v643 = vsub.f32 %v627, %v635
        %v644 = vsub.f32 %v628, %v636
        %v645 = vsub.f32 %v629, %v637
        %v646 = vsub.f32 %v630, %v638
        %v647 = vsub.f32 %v631, %v639
        %v648 = vsub.f32 %v632, %v640
        %v649 = vmax.f32 %v641, 0.0
        %v650 = vmax.f32 %v642, 0.0
        %v651 = vmax.f32 %v643, 0.0
        %v652 = vmax.f32 %v644, 0.0
        %v653 = vmax.f32 %v645, 0.0
        %v654 = vmax.f32 %v646, 0.0
        %v655 = vmax.f32 %v647, 0.0
        %v656 = vmax.f32 %v648, 0.0
        %v657 = vadd.f32 %v649, 1e-05
        %v658 = vadd.f32 %v650, 1e-05
        %v659 = vadd.f32 %v651, 1e-05
        %v660 = vadd.f32 %v652, 1e-05
        %v661 = vadd.f32 %v653, 1e-05
        %v662 = vadd.f32 %v654, 1e-05
        %v663 = vadd.f32 %v655, 1e-05
        %v664 = vadd.f32 %v656, 1e-05
        %v665 = vrsqrt.pop %v657
        %v666 = vrsqrt.pop %v658
        %v667 = vrsqrt.pop %v659
        %v668 = vrsqrt.pop %v660
        %v669 = vrsqrt.pop %v661
        %v670 = vrsqrt.pop %v662
        %v671 = vrsqrt.pop %v663
        %v672 = vrsqrt.pop %v664
        %v673 = vmul.f32 %v507, %v665
        %v674 = vmul.f32 %v509, %v665
        %v675 = vmul.f32 %v513, %v666
        %v676 = vmul.f32 %v515, %v666
        %v677 = vmul.f32 %v519, %v667
        %v678 = vmul.f32 %v521, %v667
        %v679 = vmul.f32 %v525, %v668
        %v680 = vmul.f32 %v527, %v668
        %v681 = vmul.f32 %v531, %v669
        %v682 = vmul.f32 %v533, %v669
        %v683 = vmul.f32 %v537, %v670
        %v684 = vmul.f32 %v539, %v670
        %v685 = vmul.f32 %v543, %v671
        %v686 = vmul.f32 %v545, %v671
        %v687 = vmul.f32 %v549, %v672
        %v688 = vmul.f32 %v551, %v672
        %v689 = vsub.f32 0.0, %v577
        %v690 = vsub.f32 0.0, %v578
        %v691 = vsub.f32 0.0, %v579
        %v692 = vsub.f32 0.0, %v580
        %v693 = vsub.f32 0.0, %v581
        %v694 = vsub.f32 0.0, %v582
        %v695 = vsub.f32 0.0, %v583
        %v696 = vsub.f32 0.0, %v584
        %v697 = vmul.f32 %v689, %v665
        %v698 = vmul.f32 %v690, %v666
        %v699 = vmul.f32 %v691, %v667
        %v700 = vmul.f32 %v692, %v668
        %v701 = vmul.f32 %v693, %v669
        %v702 = vmul.f32 %v694, %v670
        %v703 = vmul.f32 %v695, %v671
        %v704 = vmul.f32 %v696, %v672
        %v705 = vadd.f32 %v673, %v697
        %v706 = vadd.f32 %v674, %v697
        %v707 = vadd.f32 %v675, %v698
        %v708 = vadd.f32 %v676, %v698
        %v709 = vadd.f32 %v677, %v699
        %v710 = vadd.f32 %v678, %v699
        %v711 = vadd.f32 %v679, %v700
        %v712 = vadd.f32 %v680, %v700
        %v713 = vadd.f32 %v681, %v701
        %v714 = vadd.f32 %v682, %v701
        %v715 = vadd.f32 %v683, %v702
        %v716 = vadd.f32 %v684, %v702
        %v717 = vadd.f32 %v685, %v703
        %v718 = vadd.f32 %v686, %v703
        %v719 = vadd.f32 %v687, %v704
        %v720 = vadd.f32 %v688, %v704
        %v721 = vmul.f32 %v705, 0.2
        %v722 = vmul.f32 %v706, 0.2
        %v723 = vmul.f32 %v707, 0.2
        %v724 = vmul.f32 %v708, 0.2
        %v725 = vmul.f32 %v709, 0.2
        %v726 = vmul.f32 %v710, 0.2
        %v727 = vmul.f32 %v711, 0.2
        %v728 = vmul.f32 %v712, 0.2
        %v729 = vmul.f32 %v713, 0.2
        %v730 = vmul.f32 %v714, 0.2
        %v731 = vmul.f32 %v715, 0.2
        %v732 = vmul.f32 %v716, 0.2
        %v733 = vmul.f32 %v717, 0.2
        %v734 = vmul.f32 %v718, 0.2
        %v735 = vmul.f32 %v719, 0.2
        %v736 = vmul.f32 %v720, 0.2
        %v737 = vmax.f32 %v705, %v721
        %v738 = vmax.f32 %v706, %v722
        %v739 = vmax.f32 %v707, %v723
        %v740 = vmax.f32 %v708, %v724
        %v741 = vmax.f32 %v709, %v725
        %v742 = vmax.f32 %v710, %v726
        %v743 = vmax.f32 %v711, %v727
        %v744 = vmax.f32 %v712, %v728
        %v745 = vmax.f32 %v713, %v729
        %v746 = vmax.f32 %v714, %v730
        %v747 = vmax.f32 %v715, %v731
        %v748 = vmax.f32 %v716, %v732
        %v749 = vmax.f32 %v717, %v733
        %v750 = vmax.f32 %v718, %v734
        %v751 = vmax.f32 %v719, %v735
        %v752 = vmax.f32 %v720, %v736
        %v753 = vstv %s268
        %vm754 = vcmask 523264
        %v756 = vsel %vm754, %v267, 0
        %758 = vmatprep.subr.mxu0 %v738
        %759 = vmatpush1.msra.mxu0 %v737
        %760 = vmatprep.subr.mxu0 %v740
        %761 = vmatpush1.msra.mxu0 %v739
        %762 = vmatprep.subr.mxu0 %v742
        %763 = vmatpush1.msra.mxu0 %v741
        %764 = vmatprep.subr.mxu0 %v744
        %765 = vmatpush1.msra.mxu0 %v743
        %766 = vmatprep.subr.mxu0 %v746
        %767 = vmatpush1.msra.mxu0 %v745
        %768 = vmatprep.subr.mxu0 %v748
        %769 = vmatpush1.msra.mxu0 %v747
        %770 = vmatprep.subr.mxu0 %v750
        %771 = vmatpush1.msra.mxu0 %v749
        %772 = vmatprep.subr.mxu0 %v752
        %773 = vmatpush1.msra.mxu0 %v751
        %774 = vmatprep.subr.mxu0 0.0
        %775 = vmatpush1.msra.mxu0 0.0
        %776 = vmatprep.subr.mxu0 0.0
        %777 = vmatpush1.msra.mxu0 0.0
        %778 = vmatprep.subr.mxu0 0.0
        %779 = vmatpush1.msra.mxu0 0.0
        %780 = vmatprep.subr.mxu0 0.0
        %781 = vmatpush1.msra.mxu0 0.0
        %782 = vmatprep.subr.mxu0 0.0
        %783 = vmatpush1.msra.mxu0 0.0
        %784 = vmatprep.subr.mxu0 0.0
        %785 = vmatpush1.msra.mxu0 0.0
        %786 = vmatprep.subr.mxu0 0.0
        %787 = vmatpush1.msra.mxu0 0.0
        %788 = vmatprep.subr.mxu0 0.0
        %789 = vmatpush1.msra.mxu0 0.0
        %790 = vmatprep.subr.mxu0 0.0
        %791 = vmatpush1.msra.mxu0 0.0
        %792 = vmatprep.subr.mxu0 0.0
        %793 = vmatpush1.msra.mxu0 0.0
        %794 = vmatprep.subr.mxu0 0.0
        %795 = vmatpush1.msra.mxu0 0.0
        %796 = vmatprep.subr.mxu0 0.0
        %797 = vmatpush1.msra.mxu0 0.0
        %798 = vmatprep.subr.mxu0 0.0
        %799 = vmatpush1.msra.mxu0 0.0
        %800 = vmatprep.subr.mxu0 0.0
        %801 = vmatpush1.msra.mxu0 0.0
        %802 = vmatprep.subr.mxu0 0.0
        %803 = vmatpush1.msra.mxu0 0.0
        %804 = vmatprep.subr.mxu0 0.0
        %805 = vmatpush1.msra.mxu0 0.0
        %806 = vmatprep.subr.mxu0 0.0
        %807 = vmatpush1.msra.mxu0 0.0
        %808 = vmatprep.subr.mxu0 0.0
        %809 = vmatpush1.msra.mxu0 0.0
        %810 = vmatprep.subr.mxu0 0.0
        %811 = vmatpush1.msra.mxu0 0.0
        %812 = vmatprep.subr.mxu0 0.0
        %813 = vmatpush1.msra.mxu0 0.0
        %814 = vmatprep.subr.mxu0 0.0
        %815 = vmatpush1.msra.mxu0 0.0
        %816 = vmatprep.subr.mxu0 0.0
        %817 = vmatpush1.msra.mxu0 0.0
        %818 = vmatprep.subr.mxu0 0.0
        %819 = vmatpush1.msra.mxu0 0.0
        %820 = vmatprep.subr.mxu0 0.0
        %821 = vmatpush1.msra.mxu0 0.0
        %822 = vmatprep.mubr.f32.mxu0 0.0
        %823 = vmatmul.mubr.f32.gmra.mrb[0].mxu0 %v756
        %v824 = vpop.f32.mrb[0].mxu0
        %v825 = vadd.f32 %v753, %v824
        %v826 = vpop.f32.mrb[0].mxu0
        %v827 = vadd.f32 %v753, %v826
        %828 = vdwg.mxu0
        %v829 = vxor.u32 %v825, 2147483648
        %v830 = vxor.u32 %v827, 2147483648
        %v831 = vmul.f32 %v829, 1.442695
        %v832 = vpow.pop %v831
        %v833 = vmul.f32 %v830, 1.442695
        %v834 = vpow.pop %v833
        %v835 = vadd.f32 %v832, 1.0
        %v836 = vadd.f32 %v834, 1.0
        %v837 = vrcp.pop %v835
        %v838 = vmul.f32 1.0, %v837
        %v839 = vrcp.pop %v836
        %v840 = vmul.f32 1.0, %v839
        %v843 = vcombine.low %v838, %v840
        %v845 = vunpack.c.l.s4 1966171168
        %v846 = vunpack.c.0.s8 %v845
        %v847 = vlaneseq
        %v848 = vshrl.u32 %v847, 7
        %v849 = vsub.s32 %v846, %v848
        %v850 = vrot.slane %v843, %v849
        %v852 = vunpack.c.l.s4 1966171168
        %v853 = vunpack.c.0.s8 %v852
        %v854 = vlaneseq
        %v855 = vshrl.u32 %v854, 7
        %v856 = vsub.s32 %v853, %v855
        %v857 = vrot.slane %v850, %v856
        %v859 = vlaneseq
        %vm860 = vcmp.ge.s32.totalorder %v859, 0
        %vm861 = vcmp.lt.s32.totalorder %v859, 256
        %vm862 = vmand %vm860, %vm861
        %863 = vst.msk [vmem:[%s245] sm:$0x3] %vm862, %v857
        %s864 = sand.u32 %s160, 1
        %s865 = scalar_lea.sflag [#allocation4], %s864
        %s866 = sand.u32 %s160, 1
        %s867 = smul.addr %s866, 2
        %s868 = scalar_lea.vmem [#allocation3], %s867
        // Predicated region
        $region45: #{tpu_custom_call.1} parent=43 // pred_check
          %p869 = pneg %p170
        $region46: #{tpu_custom_call.1} parent=43 // pred_check_branch
          %871 = sbr.rel (%p869) target = $region48
        $region47: #{tpu_custom_call.1} parent=43 // pred_region
          %s873 = ssub.s32 32, 32
          %874 = vsyncadd %s865, %s873
          %s875 = smul.addr %s21, 2
          %s876 = smul.addr %s875, 16
          %s877 = scalar_lea.hbm %s6, %s876
          %s879 = sshll.u32 %s868, 4
          %s880 = int_to_ptr.vmem [resolvable:$true] %s879
          %882 = dma.vmem_to_hbm [thread:$0]  %s880, 32, %s877, %s865
        $region48: #{tpu_custom_call.1} parent=43 // pred_fallthru
          _
      $region44: #{tpu_custom_call.1} parent=5 // pred_fallthru
        _
      %p883 = scmp.le.s32.totalorder 2, %s16
      // Predicated region
      $region49: #{tpu_custom_call.1} parent=5 // pred_check
        %p884 = pneg %p883
      $region50: #{tpu_custom_call.1} parent=5 // pred_check_branch
        %886 = sbr.rel (%p884) target = $region52
      $region51: #{tpu_custom_call.1} parent=5 // pred_region
        %s887 = ssub.s32 %s16, 2
        // Predicated region
        $region53: #{tpu_custom_call.1} parent=51 // pred_check
          %p888 = pneg %p176
        $region54: #{tpu_custom_call.1} parent=51 // pred_check_branch
          %890 = sbr.rel (%p888) target = $region56
        $region55: #{tpu_custom_call.1} parent=51 // pred_region
          %s891 = sand.u32 %s161, 1
          %s892 = scalar_lea.sflag [#allocation4], %s891
          %s893 = sand.u32 %s161, 1
          %s894 = smul.addr %s893, 2
          %s895 = scalar_lea.vmem [#allocation3], %s894
          %896 = dma.done %s892, 32
        $region56: #{tpu_custom_call.1} parent=51 // pred_fallthru
          _
      $region52: #{tpu_custom_call.1} parent=5 // pred_fallthru
        _
    $region6: #{tpu_custom_call.1} parent=1 // loop_footer
      %s20 = sadd.s32 1, %s16
    $region7: #{tpu_custom_call.1} parent=1 // loop_footer_branch
      %15 = sbr.rel target = $region3
    $region8: #{tpu_custom_call.1} parent=1 // loop_exit
      _
    %897 = vsyncpa [#allocation4], 1
    %s898 = scalar_lea.sflag [#allocation4], 1
    %899 = vsyncpa %s898, 1

</llo_original>
